<compile_context>
chip_gen: v5e
topology: v5e:2x2
jax: 0.10.0
libtpu: 0.0.40
codegen_flags: <defaults>
</compile_context>

<pallas_src>
import functools

import jax
import jax.numpy as jnp
from jax.experimental import pallas as pl
from jax.experimental.pallas import tpu as pltpu

LAYER_NORM_EPS = 1e-12  # BertLayerNorm default

_SQRT_2_OVER_PI = 0.7978845608028654


def _gelu(x):
    # tanh-approx GELU: 0.5*x*(1 + tanh(sqrt(2/pi)*(x + 0.044715*x^3)))
    # tanh goes to the EUP slot; only the short polynomial lands on the VALU.
    return 0.5 * x * (1.0 + jnp.tanh(_SQRT_2_OVER_PI * (x + 0.044715 * x * x * x)))


def tag_lm_head_kernel(x_ref, w1_ref, b1_ref, g_ref, beta_ref, w2_ref, b2_ref, o_ref):
    # f32 -> bf16 cast of the activation tile happens here (hidden under MXU).
    x_bf = x_ref[...].astype(jnp.bfloat16)

    # dense: x @ W1 + b1  (bf16 MXU operands, f32 accumulation)
    h = jnp.dot(x_bf, w1_ref[...], preferred_element_type=jnp.float32) + b1_ref[...]

    # gelu (f32 elementwise, VPU + EUP)
    h = _gelu(h)

    # BertLayerNorm over the hidden axis (f32)
    mean = jnp.mean(h, axis=-1, keepdims=True)
    c = h - mean
    var = jnp.mean(c * c, axis=-1, keepdims=True)
    hn = c * jax.lax.rsqrt(var + LAYER_NORM_EPS)
    hn = hn * g_ref[...] + beta_ref[...]

    # decoder: hn @ W2 + bias  (bf16 MXU operands, f32 accumulation)
    out = jnp.dot(hn.astype(jnp.bfloat16), w2_ref[...],
                  preferred_element_type=jnp.float32) + b2_ref[...]
    o_ref[...] = out.astype(o_ref.dtype)


def prepare_params(params):
    """One-time parameter prep: bf16 MXU weights, decoder padded to 128 lanes.

    Call once per parameter set; reuse the result across forward calls so the
    cast/pad HBM traffic is not paid per call.
    """
    w1, b1, gamma, beta, w2, b2 = params
    T = w2.shape[1]
    t_pad = pl.cdiv(T, 128) * 128
    w1_bf = w1.astype(jnp.bfloat16)
    w2_bf = jnp.pad(w2, ((0, 0), (0, t_pad - T))).astype(jnp.bfloat16)
    b2_p = jnp.pad(b2, ((0, 0), (0, t_pad - T)))
    return (w1_bf, b1, gamma, beta, w2_bf, b2_p)


def _pick_block_rows(n_tokens):
    """512-row tiles for large N; for small N aim for exactly 2 grid steps so
    both v7x TensorCores get work (rows rounded up to the 8-sublane granule)."""
    if n_tokens >= 1024:
        return 512
    half = -(-n_tokens // 2)              # ceil(N / 2)
    return max(((half + 7) // 8) * 8, 8)  # round up to sublane granule


def _vmem_limit_bytes():
    """Generation-aware scoped-VMEM limit: ~96 MiB on 128-MiB chips (v5e/v6e),
    48 MiB on 64-MiB chips (v7x)."""
    cap = 64 * 1024 * 1024
    try:
        info = pltpu.get_tpu_info()
        cap = getattr(info, "vmem_capacity_bytes", cap)
    except Exception:
        pass
    if cap >= 128 * 1024 * 1024:
        return 96 * 1024 * 1024
    return 48 * 1024 * 1024


@functools.partial(
    jax.jit,
    static_argnames=("num_tag", "block_rows", "vmem_limit", "single_buffer_weights"),
)
def _tag_lm_head_jit(features, w1_bf, b1, gamma, beta, w2_bf, b2_p, *,
                     num_tag, block_rows, vmem_limit, single_buffer_weights):
    B, S, H = features.shape
    N = B * S
    t_pad = w2_bf.shape[1]

    n_blocks = pl.cdiv(N, block_rows)
    n_pad = n_blocks * block_rows

    x2d = features.reshape(N, H)
    if n_pad != N:  # pad token rows only when needed (no dropped tail rows)
        x2d = jnp.pad(x2d, ((0, n_pad - N), (0, 0)))

    if single_buffer_weights:
        # Grid-invariant operands: single-buffer to halve their VMEM footprint.
        def resident(shape):
            return pl.BlockSpec(shape, lambda i: (0, 0), pipeline_mode=pl.Buffered(1))
    else:
        def resident(shape):
            return pl.BlockSpec(shape, lambda i: (0, 0))

    out2d = pl.pallas_call(
        tag_lm_head_kernel,
        out_shape=jax.ShapeDtypeStruct((n_pad, t_pad), features.dtype),
        grid_spec=pltpu.PrefetchScalarGridSpec(
            num_scalar_prefetch=0,
            grid=(n_blocks,),
            in_specs=[
                pl.BlockSpec((block_rows, H), lambda i: (i, 0)),  # x tile (f32)
                resident((H, H)),          # dense weight (bf16, resident)
                resident((1, H)),          # dense bias
                resident((1, H)),          # LN gamma
                resident((1, H)),          # LN beta
                resident((H, t_pad)),      # decoder weight (bf16, resident)
                resident((1, t_pad)),      # decoder bias
            ],
            out_specs=pl.BlockSpec((block_rows, t_pad), lambda i: (i, 0)),
        ),
        compiler_params=pltpu.CompilerParams(
            dimension_semantics=("parallel",),
            vmem_limit_bytes=vmem_limit,
        ),
    )(x2d, w1_bf, b1, gamma, beta, w2_bf, b2_p)

    # Padded rows / padded tag columns are sliced away here.
    return out2d[:N, :num_tag].reshape(B, S, num_tag)


def tag_lm_head(features, prepared_params, *, num_tag, block_rows=None,
                single_buffer_weights=True):
    """features: [B, S, H] float32 -> logits [B, S, num_tag]."""
    B, S, _ = features.shape
    if block_rows is None:
        block_rows = _pick_block_rows(B * S)
    return _tag_lm_head_jit(
        features, *prepared_params,
        num_tag=num_tag, block_rows=block_rows,
        vmem_limit=_vmem_limit_bytes(),
        single_buffer_weights=single_buffer_weights,
    )


def init_params(key, hidden_size, num_tag):
    k1, k2, _ = jax.random.split(key, 3)
    scale = 0.02
    # stored as (in, out) so the kernel does x @ W
    w1 = scale * jax.random.normal(k1, (hidden_size, hidden_size), jnp.float32)
    b1 = jnp.zeros((1, hidden_size), jnp.float32)
    gamma = jnp.ones((1, hidden_size), jnp.float32)
    beta = jnp.zeros((1, hidden_size), jnp.float32)
    w2 = scale * jax.random.normal(k2, (hidden_size, num_tag), jnp.float32)
    b2 = jnp.zeros((1, num_tag), jnp.float32)  # self.bias assigned to decoder.bias
    return (w1, b1, gamma, beta, w2, b2)


def reference(features, params):
    # pure-JAX f32 reference of the same forward pass (exact erf GELU)
    w1, b1, gamma, beta, w2, b2 = params
    h = features @ w1 + b1[0]
    h = 0.5 * h * (1.0 + jax.scipy.special.erf(h / jnp.sqrt(2.0)))
    mean = h.mean(-1, keepdims=True)
    var = ((h - mean) ** 2).mean(-1, keepdims=True)
    h = (h - mean) / jnp.sqrt(var + LAYER_NORM_EPS) * gamma[0] + beta[0]
    return h @ w2 + b2[0]


if __name__ == "__main__":
    key = jax.random.PRNGKey(0)
    k_x, k_p = jax.random.split(key)

    batch, seq, hidden, num_tag = 2, 8, 32, 10
    features = jax.random.normal(k_x, (batch, seq, hidden), jnp.float32)
    params = init_params(k_p, hidden, num_tag)
    prepared = prepare_params(params)

    try:
        out = tag_lm_head(features, prepared, num_tag=num_tag)
    except Exception:
        # Fallback if single-buffered (Buffered(1)) weight specs are not
        # supported by this JAX/Mosaic build: plain double-buffered specs.
        out = tag_lm_head(features, prepared, num_tag=num_tag,
                          single_buffer_weights=False)
    out = jax.block_until_ready(out)

    ref = reference(features, params)
    assert out.shape == (batch, seq, num_tag)
    # bf16 MXU operands + tanh-approx GELU vs. exact f32/erf reference.
    assert jnp.max(jnp.abs(out - ref)) < 2e-2, "mismatch vs reference"

    print("KERNEL_OK")
</pallas_src>

<mosaic_0001>
module attributes {stable_mosaic.version = 11 : i64} {
  func.func @tag_lm_head_kernel(%arg0: i32, %arg1: memref<8x32xf32, #tpu.memory_space<vmem>>, %arg2: memref<32x32xbf16, #tpu.memory_space<vmem>>, %arg3: memref<1x32xf32, #tpu.memory_space<vmem>>, %arg4: memref<1x32xf32, #tpu.memory_space<vmem>>, %arg5: memref<1x32xf32, #tpu.memory_space<vmem>>, %arg6: memref<32x128xbf16, #tpu.memory_space<vmem>>, %arg7: memref<1x128xf32, #tpu.memory_space<vmem>>, %arg8: memref<8x128xf32, #tpu.memory_space<vmem>>) attributes {dimension_semantics = [#tpu.dimension_semantics<parallel>], iteration_bounds = array<i64: 2>, scalar_prefetch = 0 : i64, scratch_operands = 0 : i64, tpu.core_type = #tpu.core_type<tc>, window_params = [{transform_indices = @transform_0, window_bounds = array<i64: 8, 32>}, {pipeline_mode = #tpu.pipeline_mode<synchronous>, transform_indices = @transform_1, window_bounds = array<i64: 32, 32>}, {pipeline_mode = #tpu.pipeline_mode<synchronous>, transform_indices = @transform_2, window_bounds = array<i64: 1, 32>}, {pipeline_mode = #tpu.pipeline_mode<synchronous>, transform_indices = @transform_3, window_bounds = array<i64: 1, 32>}, {pipeline_mode = #tpu.pipeline_mode<synchronous>, transform_indices = @transform_4, window_bounds = array<i64: 1, 32>}, {pipeline_mode = #tpu.pipeline_mode<synchronous>, transform_indices = @transform_5, window_bounds = array<i64: 32, 128>}, {pipeline_mode = #tpu.pipeline_mode<synchronous>, transform_indices = @transform_6, window_bounds = array<i64: 1, 128>}, {transform_indices = @transform_7, window_bounds = array<i64: 8, 128>}]} {
    %c0 = arith.constant 0 : index
    %c0_0 = arith.constant 0 : index
    %0 = vector.load %arg1[%c0, %c0_0] : memref<8x32xf32, #tpu.memory_space<vmem>>, vector<8x32xf32>
    %1 = arith.truncf %0 : vector<8x32xf32> to vector<8x32xbf16>
    %c0_1 = arith.constant 0 : index
    %c0_2 = arith.constant 0 : index
    %2 = vector.load %arg2[%c0_1, %c0_2] : memref<32x32xbf16, #tpu.memory_space<vmem>>, vector<32x32xbf16>
    %cst = arith.constant dense<0.000000e+00> : vector<8x32xf32>
    %3 = tpu.matmul %1, %2, %cst {dimension_numbers = #tpu.dot_dimension_numbers<[1], [0], [0], [1], [0, 0, 1, 1], [], []>} : vector<8x32xbf16>, vector<32x32xbf16>, vector<8x32xf32> -> vector<8x32xf32>
    %c0_3 = arith.constant 0 : index
    %c0_4 = arith.constant 0 : index
    %4 = vector.load %arg3[%c0_3, %c0_4] : memref<1x32xf32, #tpu.memory_space<vmem>>, vector<1x32xf32>
    %5 = vector.broadcast %4 : vector<1x32xf32> to vector<8x32xf32>
    %6 = arith.addf %3, %5 : vector<8x32xf32>
    %cst_5 = arith.constant 5.000000e-01 : f32
    %7 = vector.broadcast %cst_5 : f32 to vector<8x32xf32>
    %8 = arith.mulf %7, %6 : vector<8x32xf32>
    %cst_6 = arith.constant 4.471500e-02 : f32
    %9 = vector.broadcast %cst_6 : f32 to vector<8x32xf32>
    %10 = arith.mulf %9, %6 : vector<8x32xf32>
    %11 = arith.mulf %10, %6 : vector<8x32xf32>
    %12 = arith.mulf %11, %6 : vector<8x32xf32>
    %13 = arith.addf %6, %12 : vector<8x32xf32>
    %cst_7 = arith.constant 0.797884583 : f32
    %14 = vector.broadcast %cst_7 : f32 to vector<8x32xf32>
    %15 = arith.mulf %14, %13 : vector<8x32xf32>
    %16 = math.tanh %15 : vector<8x32xf32>
    %cst_8 = arith.constant 1.000000e+00 : f32
    %17 = vector.broadcast %cst_8 : f32 to vector<8x32xf32>
    %18 = arith.addf %17, %16 : vector<8x32xf32>
    %19 = arith.mulf %8, %18 : vector<8x32xf32>
    %cst_9 = arith.constant dense<0.000000e+00> : vector<8xf32>
    %20 = vector.multi_reduction <add>, %19, %cst_9 [1] : vector<8x32xf32> to vector<8xf32>
    %21 = vector.shape_cast %20 : vector<8xf32> to vector<8x1xf32>
    %cst_10 = arith.constant 3.200000e+01 : f32
    %22 = vector.broadcast %cst_10 : f32 to vector<8x1xf32>
    %23 = arith.divf %21, %22 : vector<8x1xf32>
    %24 = vector.broadcast %23 : vector<8x1xf32> to vector<8x32xf32>
    %25 = arith.subf %19, %24 : vector<8x32xf32>
    %26 = arith.mulf %25, %25 : vector<8x32xf32>
    %cst_11 = arith.constant dense<0.000000e+00> : vector<8xf32>
    %27 = vector.multi_reduction <add>, %26, %cst_11 [1] : vector<8x32xf32> to vector<8xf32>
    %28 = vector.shape_cast %27 : vector<8xf32> to vector<8x1xf32>
    %cst_12 = arith.constant 3.200000e+01 : f32
    %29 = vector.broadcast %cst_12 : f32 to vector<8x1xf32>
    %30 = arith.divf %28, %29 : vector<8x1xf32>
    %cst_13 = arith.constant 9.99999996E-13 : f32
    %31 = vector.broadcast %cst_13 : f32 to vector<8x1xf32>
    %32 = arith.addf %30, %31 : vector<8x1xf32>
    %33 = math.rsqrt %32 : vector<8x1xf32>
    %34 = vector.broadcast %33 : vector<8x1xf32> to vector<8x32xf32>
    %35 = arith.mulf %25, %34 : vector<8x32xf32>
    %c0_14 = arith.constant 0 : index
    %c0_15 = arith.constant 0 : index
    %36 = vector.load %arg4[%c0_14, %c0_15] : memref<1x32xf32, #tpu.memory_space<vmem>>, vector<1x32xf32>
    %37 = vector.broadcast %36 : vector<1x32xf32> to vector<8x32xf32>
    %38 = arith.mulf %35, %37 : vector<8x32xf32>
    %c0_16 = arith.constant 0 : index
    %c0_17 = arith.constant 0 : index
    %39 = vector.load %arg5[%c0_16, %c0_17] : memref<1x32xf32, #tpu.memory_space<vmem>>, vector<1x32xf32>
    %40 = vector.broadcast %39 : vector<1x32xf32> to vector<8x32xf32>
    %41 = arith.addf %38, %40 : vector<8x32xf32>
    %42 = arith.truncf %41 : vector<8x32xf32> to vector<8x32xbf16>
    %c0_18 = arith.constant 0 : index
    %c0_19 = arith.constant 0 : index
    %43 = vector.load %arg6[%c0_18, %c0_19] : memref<32x128xbf16, #tpu.memory_space<vmem>>, vector<32x128xbf16>
    %cst_20 = arith.constant dense<0.000000e+00> : vector<8x128xf32>
    %44 = tpu.matmul %42, %43, %cst_20 {dimension_numbers = #tpu.dot_dimension_numbers<[1], [0], [0], [1], [0, 0, 1, 1], [], []>} : vector<8x32xbf16>, vector<32x128xbf16>, vector<8x128xf32> -> vector<8x128xf32>
    %c0_21 = arith.constant 0 : index
    %c0_22 = arith.constant 0 : index
    %45 = vector.load %arg7[%c0_21, %c0_22] : memref<1x128xf32, #tpu.memory_space<vmem>>, vector<1x128xf32>
    %46 = vector.broadcast %45 : vector<1x128xf32> to vector<8x128xf32>
    %47 = arith.addf %44, %46 : vector<8x128xf32>
    %c0_23 = arith.constant 0 : index
    %c0_24 = arith.constant 0 : index
    %48 = vector.load %arg8[%c0_23, %c0_24] : memref<8x128xf32, #tpu.memory_space<vmem>>, vector<8x128xf32>
    tpu.vector_store %arg8[%c0_23, %c0_24], %47 {strides = array<i32>} : memref<8x128xf32, #tpu.memory_space<vmem>>, vector<8x128xf32>,
    return
  }
  func.func @transform_0(%arg0: i32) -> (i32, i32) {
    %c0_i32 = arith.constant 0 : i32
    %c0_i32_0 = arith.constant 0 : i32
    return %arg0, %c0_i32 : i32, i32
  }
  func.func @transform_1(%arg0: i32) -> (i32, i32) {
    %c0_i32 = arith.constant 0 : i32
    %c0_i32_0 = arith.constant 0 : i32
    %c0_i32_1 = arith.constant 0 : i32
    return %c0_i32, %c0_i32_0 : i32, i32
  }
  func.func @transform_2(%arg0: i32) -> (i32, i32) {
    %c0_i32 = arith.constant 0 : i32
    %c0_i32_0 = arith.constant 0 : i32
    %c0_i32_1 = arith.constant 0 : i32
    return %c0_i32, %c0_i32_0 : i32, i32
  }
  func.func @transform_3(%arg0: i32) -> (i32, i32) {
    %c0_i32 = arith.constant 0 : i32
    %c0_i32_0 = arith.constant 0 : i32
    %c0_i32_1 = arith.constant 0 : i32
    return %c0_i32, %c0_i32_0 : i32, i32
  }
  func.func @transform_4(%arg0: i32) -> (i32, i32) {
    %c0_i32 = arith.constant 0 : i32
    %c0_i32_0 = arith.constant 0 : i32
    %c0_i32_1 = arith.constant 0 : i32
    return %c0_i32, %c0_i32_0 : i32, i32
  }
  func.func @transform_5(%arg0: i32) -> (i32, i32) {
    %c0_i32 = arith.constant 0 : i32
    %c0_i32_0 = arith.constant 0 : i32
    %c0_i32_1 = arith.constant 0 : i32
    return %c0_i32, %c0_i32_0 : i32, i32
  }
  func.func @transform_6(%arg0: i32) -> (i32, i32) {
    %c0_i32 = arith.constant 0 : i32
    %c0_i32_0 = arith.constant 0 : i32
    %c0_i32_1 = arith.constant 0 : i32
    return %c0_i32, %c0_i32_0 : i32, i32
  }
  func.func @transform_7(%arg0: i32) -> (i32, i32) {
    %c0_i32 = arith.constant 0 : i32
    %c0_i32_0 = arith.constant 0 : i32
    return %arg0, %c0_i32 : i32, i32
  }
}

module attributes {stable_mosaic.version = 11 : i64} {
  func.func @tag_lm_head_kernel(%arg0: i32, %arg1: memref<8x32xf32, #tpu.memory_space<vmem>>, %arg2: memref<32x32xbf16, #tpu.memory_space<vmem>>, %arg3: memref<1x32xf32, #tpu.memory_space<vmem>>, %arg4: memref<1x32xf32, #tpu.memory_space<vmem>>, %arg5: memref<1x32xf32, #tpu.memory_space<vmem>>, %arg6: memref<32x128xbf16, #tpu.memory_space<vmem>>, %arg7: memref<1x128xf32, #tpu.memory_space<vmem>>, %arg8: memref<8x128xf32, #tpu.memory_space<vmem>>) attributes {dimension_semantics = [#tpu.dimension_semantics<parallel>], iteration_bounds = array<i64: 2>, scalar_prefetch = 0 : i64, scratch_operands = 0 : i64, tpu.core_type = #tpu.core_type<tc>, window_params = [{transform_indices = @transform_0, window_bounds = array<i64: 8, 32>}, {pipeline_mode = #tpu.pipeline_mode<synchronous>, transform_indices = @transform_1, window_bounds = array<i64: 32, 32>}, {pipeline_mode = #tpu.pipeline_mode<synchronous>, transform_indices = @transform_2, window_bounds = array<i64: 1, 32>}, {pipeline_mode = #tpu.pipeline_mode<synchronous>, transform_indices = @transform_3, window_bounds = array<i64: 1, 32>}, {pipeline_mode = #tpu.pipeline_mode<synchronous>, transform_indices = @transform_4, window_bounds = array<i64: 1, 32>}, {pipeline_mode = #tpu.pipeline_mode<synchronous>, transform_indices = @transform_5, window_bounds = array<i64: 32, 128>}, {pipeline_mode = #tpu.pipeline_mode<synchronous>, transform_indices = @transform_6, window_bounds = array<i64: 1, 128>}, {transform_indices = @transform_7, window_bounds = array<i64: 8, 128>}]} {
    %c0 = arith.constant 0 : index
    %c0_0 = arith.constant 0 : index
    %0 = vector.load %arg1[%c0, %c0_0] : memref<8x32xf32, #tpu.memory_space<vmem>>, vector<8x32xf32>
    %1 = arith.truncf %0 : vector<8x32xf32> to vector<8x32xbf16>
    %c0_1 = arith.constant 0 : index
    %c0_2 = arith.constant 0 : index
    %2 = vector.load %arg2[%c0_1, %c0_2] : memref<32x32xbf16, #tpu.memory_space<vmem>>, vector<32x32xbf16>
    %cst = arith.constant dense<0.000000e+00> : vector<8x32xf32>
    %3 = tpu.matmul %1, %2, %cst {dimension_numbers = #tpu.dot_dimension_numbers<[1], [0], [0], [1], [0, 0, 1, 1], [], []>} : vector<8x32xbf16>, vector<32x32xbf16>, vector<8x32xf32> -> vector<8x32xf32>
    %c0_3 = arith.constant 0 : index
    %c0_4 = arith.constant 0 : index
    %4 = vector.load %arg3[%c0_3, %c0_4] : memref<1x32xf32, #tpu.memory_space<vmem>>, vector<1x32xf32>
    %5 = vector.broadcast %4 : vector<1x32xf32> to vector<8x32xf32>
    %6 = arith.addf %3, %5 : vector<8x32xf32>
    %cst_5 = arith.constant 5.000000e-01 : f32
    %7 = vector.broadcast %cst_5 : f32 to vector<8x32xf32>
    %8 = arith.mulf %7, %6 : vector<8x32xf32>
    %cst_6 = arith.constant 4.471500e-02 : f32
    %9 = vector.broadcast %cst_6 : f32 to vector<8x32xf32>
    %10 = arith.mulf %9, %6 : vector<8x32xf32>
    %11 = arith.mulf %10, %6 : vector<8x32xf32>
    %12 = arith.mulf %11, %6 : vector<8x32xf32>
    %13 = arith.addf %6, %12 : vector<8x32xf32>
    %cst_7 = arith.constant 0.797884583 : f32
    %14 = vector.broadcast %cst_7 : f32 to vector<8x32xf32>
    %15 = arith.mulf %14, %13 : vector<8x32xf32>
    %16 = math.tanh %15 : vector<8x32xf32>
    %cst_8 = arith.constant 1.000000e+00 : f32
    %17 = vector.broadcast %cst_8 : f32 to vector<8x32xf32>
    %18 = arith.addf %17, %16 : vector<8x32xf32>
    %19 = arith.mulf %8, %18 : vector<8x32xf32>
    %cst_9 = arith.constant dense<0.000000e+00> : vector<8xf32>
    %20 = vector.multi_reduction <add>, %19, %cst_9 [1] : vector<8x32xf32> to vector<8xf32>
    %21 = vector.shape_cast %20 : vector<8xf32> to vector<8x1xf32>
    %cst_10 = arith.constant 3.200000e+01 : f32
    %22 = vector.broadcast %cst_10 : f32 to vector<8x1xf32>
    %23 = arith.divf %21, %22 : vector<8x1xf32>
    %24 = vector.broadcast %23 : vector<8x1xf32> to vector<8x32xf32>
    %25 = arith.subf %19, %24 : vector<8x32xf32>
    %26 = arith.mulf %25, %25 : vector<8x32xf32>
    %cst_11 = arith.constant dense<0.000000e+00> : vector<8xf32>
    %27 = vector.multi_reduction <add>, %26, %cst_11 [1] : vector<8x32xf32> to vector<8xf32>
    %28 = vector.shape_cast %27 : vector<8xf32> to vector<8x1xf32>
    %cst_12 = arith.constant 3.200000e+01 : f32
    %29 = vector.broadcast %cst_12 : f32 to vector<8x1xf32>
    %30 = arith.divf %28, %29 : vector<8x1xf32>
    %cst_13 = arith.constant 9.99999996E-13 : f32
    %31 = vector.broadcast %cst_13 : f32 to vector<8x1xf32>
    %32 = arith.addf %30, %31 : vector<8x1xf32>
    %33 = math.rsqrt %32 : vector<8x1xf32>
    %34 = vector.broadcast %33 : vector<8x1xf32> to vector<8x32xf32>
    %35 = arith.mulf %25, %34 : vector<8x32xf32>
    %c0_14 = arith.constant 0 : index
    %c0_15 = arith.constant 0 : index
    %36 = vector.load %arg4[%c0_14, %c0_15] : memref<1x32xf32, #tpu.memory_space<vmem>>, vector<1x32xf32>
    %37 = vector.broadcast %36 : vector<1x32xf32> to vector<8x32xf32>
    %38 = arith.mulf %35, %37 : vector<8x32xf32>
    %c0_16 = arith.constant 0 : index
    %c0_17 = arith.constant 0 : index
    %39 = vector.load %arg5[%c0_16, %c0_17] : memref<1x32xf32, #tpu.memory_space<vmem>>, vector<1x32xf32>
    %40 = vector.broadcast %39 : vector<1x32xf32> to vector<8x32xf32>
    %41 = arith.addf %38, %40 : vector<8x32xf32>
    %42 = arith.truncf %41 : vector<8x32xf32> to vector<8x32xbf16>
    %c0_18 = arith.constant 0 : index
    %c0_19 = arith.constant 0 : index
    %43 = vector.load %arg6[%c0_18, %c0_19] : memref<32x128xbf16, #tpu.memory_space<vmem>>, vector<32x128xbf16>
    %cst_20 = arith.constant dense<0.000000e+00> : vector<8x128xf32>
    %44 = tpu.matmul %42, %43, %cst_20 {dimension_numbers = #tpu.dot_dimension_numbers<[1], [0], [0], [1], [0, 0, 1, 1], [], []>} : vector<8x32xbf16>, vector<32x128xbf16>, vector<8x128xf32> -> vector<8x128xf32>
    %c0_21 = arith.constant 0 : index
    %c0_22 = arith.constant 0 : index
    %45 = vector.load %arg7[%c0_21, %c0_22] : memref<1x128xf32, #tpu.memory_space<vmem>>, vector<1x128xf32>
    %46 = vector.broadcast %45 : vector<1x128xf32> to vector<8x128xf32>
    %47 = arith.addf %44, %46 : vector<8x128xf32>
    %c0_23 = arith.constant 0 : index
    %c0_24 = arith.constant 0 : index
    %48 = vector.load %arg8[%c0_23, %c0_24] : memref<8x128xf32, #tpu.memory_space<vmem>>, vector<8x128xf32>
    tpu.vector_store %arg8[%c0_23, %c0_24], %47 {strides = array<i32>} : memref<8x128xf32, #tpu.memory_space<vmem>>, vector<8x128xf32>,
    return
  }
  func.func @transform_0(%arg0: i32) -> (i32, i32) {
    %c0_i32 = arith.constant 0 : i32
    %c0_i32_0 = arith.constant 0 : i32
    return %arg0, %c0_i32 : i32, i32
  }
  func.func @transform_1(%arg0: i32) -> (i32, i32) {
    %c0_i32 = arith.constant 0 : i32
    %c0_i32_0 = arith.constant 0 : i32
    %c0_i32_1 = arith.constant 0 : i32
    return %c0_i32, %c0_i32_0 : i32, i32
  }
  func.func @transform_2(%arg0: i32) -> (i32, i32) {
    %c0_i32 = arith.constant 0 : i32
    %c0_i32_0 = arith.constant 0 : i32
    %c0_i32_1 = arith.constant 0 : i32
    return %c0_i32, %c0_i32_0 : i32, i32
  }
  func.func @transform_3(%arg0: i32) -> (i32, i32) {
    %c0_i32 = arith.constant 0 : i32
    %c0_i32_0 = arith.constant 0 : i32
    %c0_i32_1 = arith.constant 0 : i32
    return %c0_i32, %c0_i32_0 : i32, i32
  }
  func.func @transform_4(%arg0: i32) -> (i32, i32) {
    %c0_i32 = arith.constant 0 : i32
    %c0_i32_0 = arith.constant 0 : i32
    %c0_i32_1 = arith.constant 0 : i32
    return %c0_i32, %c0_i32_0 : i32, i32
  }
  func.func @transform_5(%arg0: i32) -> (i32, i32) {
    %c0_i32 = arith.constant 0 : i32
    %c0_i32_0 = arith.constant 0 : i32
    %c0_i32_1 = arith.constant 0 : i32
    return %c0_i32, %c0_i32_0 : i32, i32
  }
  func.func @transform_6(%arg0: i32) -> (i32, i32) {
    %c0_i32 = arith.constant 0 : i32
    %c0_i32_0 = arith.constant 0 : i32
    %c0_i32_1 = arith.constant 0 : i32
    return %c0_i32, %c0_i32_0 : i32, i32
  }
  func.func @transform_7(%arg0: i32) -> (i32, i32) {
    %c0_i32 = arith.constant 0 : i32
    %c0_i32_0 = arith.constant 0 : i32
    return %arg0, %c0_i32 : i32, i32
  }
}

</mosaic_0001>

<llo_original>
// kernel: _tag_lm_head_jit.1
$region0: #{_tag_lm_head_jit.1}
  #allocation0 [shape = 'u32[]', space=smem, size = 0x4, offset = 0x4, fixed_abs, tag = 'smem constant byte address 0x4 - core index']
  #allocation1 [shape = 'u32[72,128]{1,0:T(1,128)}', space=vmem, size = 0x9000, scoped, tag = 'internal scratch']
  %s0 = inlined_call_operand.hbm [shape: f32[16,32], index: 0, kind: input, shape index: {}]
  %s1 = inlined_call_operand.hbm [shape: bf16[32,32], index: 1, kind: input, shape index: {}]
  %s2 = inlined_call_operand.vmem [shape: f32[1,32], index: 2, kind: input, shape index: {}]
  %s3 = inlined_call_operand.vmem [shape: f32[1,32], index: 3, kind: input, shape index: {}]
  %s4 = inlined_call_operand.vmem [shape: f32[1,32], index: 4, kind: input, shape index: {}]
  %s5 = inlined_call_operand.hbm [shape: bf16[32,128], index: 5, kind: input, shape index: {}]
  %s6 = inlined_call_operand.vmem [shape: f32[1,128], index: 6, kind: input, shape index: {}]
  %s7 = inlined_call_operand.vmem [shape: f32[16,128], index: 7, kind: output, shape index: {}]
  %s8 = sld [smem:[#allocation0]]
  $region73: #{_tag_lm_head_jit.1} parent=0
    _
  %s10 = ssub.s32 1, %s8
  %s11 = scalar_select 0, %s10, %s8
  $region1: #{_tag_lm_head_jit.1} parent=0
    #allocation2 [shape = 'u8[8192]{0}', space=vmem, size = 0x2000, scoped, tag = 'input window, operand 0']
    #allocation3 [shape = 's32[2]{0}', space=sflag, size = 0x8, scoped, tag = 'scoped memory for _tag_lm_head_jit.1']
    #allocation4 [shape = 'u8[8192]{0}', space=vmem, size = 0x2000, scoped, tag = 'input window, operand 1, single buffered']
    #allocation5 [shape = 's32[1]{0}', space=sflag, size = 0x4, scoped, tag = 'scoped memory for _tag_lm_head_jit.1']
    #allocation6 [shape = 'u8[8192]{0}', space=vmem, size = 0x2000, scoped, tag = 'input window, operand 5, single buffered']
    %12 = vsyncpa [#allocation3], 0
    %s13 = scalar_lea.sflag [#allocation3], 1
    %14 = vsyncpa %s13, 0
    %15 = vsyncpa [#allocation5], 0
    loop: start=0, step=1, limit=4
    $region2: #{_tag_lm_head_jit.1} parent=1 // loop_pre_header
      _
    $region3: #{_tag_lm_head_jit.1} parent=1 // loop_header
      %s17 = sphi 0, %s21
      %p18 = scmp.ge.s32.totalorder %s17, 4
      %s27 = sphi 0, %s29
      %s30 = sphi 0, %s27
      %s31 = sphi 0, %s30
      %s47 = sphi 0, %s31
      %s51 = sphi 0, %s51
      %s53 = sphi 0, %s51
      %s54 = sphi 0, %s53
      %s68 = sphi 0, %s54
      %s72 = sphi 0, %s72
      %s74 = sphi 0, %s72
      %s75 = sphi 0, %s74
      %s89 = sphi 0, %s75
      %s93 = sphi 0, %s93
      %s95 = sphi 0, %s93
      %s96 = sphi 0, %s95
      %s110 = sphi 0, %s96
      %s114 = sphi 0, %s114
      %s116 = sphi 0, %s114
      %s117 = sphi 0, %s116
      %s131 = sphi 0, %s117
      %s135 = sphi 0, %s135
      %s137 = sphi 0, %s135
      %s138 = sphi 0, %s137
      %s152 = sphi 0, %s138
      %s156 = sphi 0, %s156
      %s158 = sphi 0, %s156
      %s159 = sphi 0, %s158
      %s173 = sphi 0, %s159
      %s179 = sphi 0, %s181
      %s182 = sphi 0, %s179
      %s183 = sphi 0, %s182
      %s199 = sphi 0, %s183
    $region4: #{_tag_lm_head_jit.1} parent=1 // loop_header_branch
      %20 = sbr.rel (%p18) target = $region8
    $region5: #{_tag_lm_head_jit.1} parent=1 // loop_body
      %s22 = ssub.s32 %s17, 1
      %s23 = ssub.s32 %s17, 2
      %s24 = sadd.s32 %s17, 1
      %s25 = ssub.s32 %s17, %s24
      %p26 = scmp.eq.s32.totalorder %s25, 0
      %s28 = sadd.s32 %s27, 1
      %s29 = scalar_select %p26, %s27, %s28
      %p32 = pneg %p26
      %p33 = scmp.eq.s32.totalorder %s17, 1
      %p34 = por %p32, %p33
      %p35 = scmp.ne.s32.totalorder %s27, %s30
      %p36 = scmp.eq.s32.totalorder %s17, 0
      %p37 = por %p35, %p36
      %p38 = scmp.ne.s32.totalorder %s27, %s30
      %p39 = scmp.eq.s32.totalorder %s22, 1
      %p40 = por %p38, %p39
      %p41 = scmp.ne.s32.totalorder %s30, %s31
      %p42 = scmp.eq.s32.totalorder %s22, 0
      %p43 = por %p41, %p42
      %p44 = scmp.ne.s32.totalorder %s30, %s31
      %p45 = scmp.eq.s32.totalorder %s23, 1
      %p46 = por %p44, %p45
      %p48 = scmp.ne.s32.totalorder %s31, %s47
      %p49 = scmp.eq.s32.totalorder %s23, 0
      %p50 = por %p48, %p49
      %s52 = sadd.s32 %s51, 1
      %p55 = scmp.eq.s32.totalorder %s17, 1
      %p56 = scmp.ne.s32.totalorder %s51, %s53
      %p57 = scmp.eq.s32.totalorder %s17, 0
      %p58 = por %p56, %p57
      %p59 = scmp.ne.s32.totalorder %s51, %s53
      %p60 = scmp.eq.s32.totalorder %s22, 1
      %p61 = por %p59, %p60
      %p62 = scmp.ne.s32.totalorder %s53, %s54
      %p63 = scmp.eq.s32.totalorder %s22, 0
      %p64 = por %p62, %p63
      %p65 = scmp.ne.s32.totalorder %s53, %s54
      %p66 = scmp.eq.s32.totalorder %s23, 1
      %p67 = por %p65, %p66
      %p69 = scmp.ne.s32.totalorder %s54, %s68
      %p70 = scmp.eq.s32.totalorder %s23, 0
      %p71 = por %p69, %p70
      %s73 = sadd.s32 %s72, 1
      %p76 = scmp.eq.s32.totalorder %s17, 1
      %p77 = scmp.ne.s32.totalorder %s72, %s74
      %p78 = scmp.eq.s32.totalorder %s17, 0
      %p79 = por %p77, %p78
      %p80 = scmp.ne.s32.totalorder %s72, %s74
      %p81 = scmp.eq.s32.totalorder %s22, 1
      %p82 = por %p80, %p81
      %p83 = scmp.ne.s32.totalorder %s74, %s75
      %p84 = scmp.eq.s32.totalorder %s22, 0
      %p85 = por %p83, %p84
      %p86 = scmp.ne.s32.totalorder %s74, %s75
      %p87 = scmp.eq.s32.totalorder %s23, 1
      %p88 = por %p86, %p87
      %p90 = scmp.ne.s32.totalorder %s75, %s89
      %p91 = scmp.eq.s32.totalorder %s23, 0
      %p92 = por %p90, %p91
      %s94 = sadd.s32 %s93, 1
      %p97 = scmp.eq.s32.totalorder %s17, 1
      %p98 = scmp.ne.s32.totalorder %s93, %s95
      %p99 = scmp.eq.s32.totalorder %s17, 0
      %p100 = por %p98, %p99
      %p101 = scmp.ne.s32.totalorder %s93, %s95
      %p102 = scmp.eq.s32.totalorder %s22, 1
      %p103 = por %p101, %p102
      %p104 = scmp.ne.s32.totalorder %s95, %s96
      %p105 = scmp.eq.s32.totalorder %s22, 0
      %p106 = por %p104, %p105
      %p107 = scmp.ne.s32.totalorder %s95, %s96
      %p108 = scmp.eq.s32.totalorder %s23, 1
      %p109 = por %p107, %p108
      %p111 = scmp.ne.s32.totalorder %s96, %s110
      %p112 = scmp.eq.s32.totalorder %s23, 0
      %p113 = por %p111, %p112
      %s115 = sadd.s32 %s114, 1
      %p118 = scmp.eq.s32.totalorder %s17, 1
      %p119 = scmp.ne.s32.totalorder %s114, %s116
      %p120 = scmp.eq.s32.totalorder %s17, 0
      %p121 = por %p119, %p120
      %p122 = scmp.ne.s32.totalorder %s114, %s116
      %p123 = scmp.eq.s32.totalorder %s22, 1
      %p124 = por %p122, %p123
      %p125 = scmp.ne.s32.totalorder %s116, %s117
      %p126 = scmp.eq.s32.totalorder %s22, 0
      %p127 = por %p125, %p126
      %p128 = scmp.ne.s32.totalorder %s116, %s117
      %p129 = scmp.eq.s32.totalorder %s23, 1
      %p130 = por %p128, %p129
      %p132 = scmp.ne.s32.totalorder %s117, %s131
      %p133 = scmp.eq.s32.totalorder %s23, 0
      %p134 = por %p132, %p133
      %s136 = sadd.s32 %s135, 1
      %p139 = scmp.eq.s32.totalorder %s17, 1
      %p140 = scmp.ne.s32.totalorder %s135, %s137
      %p141 = scmp.eq.s32.totalorder %s17, 0
      %p142 = por %p140, %p141
      %p143 = scmp.ne.s32.totalorder %s135, %s137
      %p144 = scmp.eq.s32.totalorder %s22, 1
      %p145 = por %p143, %p144
      %p146 = scmp.ne.s32.totalorder %s137, %s138
      %p147 = scmp.eq.s32.totalorder %s22, 0
      %p148 = por %p146, %p147
      %p149 = scmp.ne.s32.totalorder %s137, %s138
      %p150 = scmp.eq.s32.totalorder %s23, 1
      %p151 = por %p149, %p150
      %p153 = scmp.ne.s32.totalorder %s138, %s152
      %p154 = scmp.eq.s32.totalorder %s23, 0
      %p155 = por %p153, %p154
      %s157 = sadd.s32 %s156, 1
      %p160 = scmp.eq.s32.totalorder %s17, 1
      %p161 = scmp.ne.s32.totalorder %s156, %s158
      %p162 = scmp.eq.s32.totalorder %s17, 0
      %p163 = por %p161, %p162
      %p164 = scmp.ne.s32.totalorder %s156, %s158
      %p165 = scmp.eq.s32.totalorder %s22, 1
      %p166 = por %p164, %p165
      %p167 = scmp.ne.s32.totalorder %s158, %s159
      %p168 = scmp.eq.s32.totalorder %s22, 0
      %p169 = por %p167, %p168
      %p170 = scmp.ne.s32.totalorder %s158, %s159
      %p171 = scmp.eq.s32.totalorder %s23, 1
      %p172 = por %p170, %p171
      %p174 = scmp.ne.s32.totalorder %s159, %s173
      %p175 = scmp.eq.s32.totalorder %s23, 0
      %p176 = por %p174, %p175
      %s177 = ssub.s32 %s17, %s24
      %p178 = scmp.eq.s32.totalorder %s177, 0
      %s180 = sadd.s32 %s179, 1
      %s181 = scalar_select %p178, %s179, %s180
      %p184 = pneg %p178
      %p185 = scmp.eq.s32.totalorder %s17, 1
      %p186 = por %p184, %p185
      %p187 = scmp.ne.s32.totalorder %s179, %s182
      %p188 = scmp.eq.s32.totalorder %s17, 0
      %p189 = por %p187, %p188
      %p190 = scmp.ne.s32.totalorder %s179, %s182
      %p191 = scmp.eq.s32.totalorder %s22, 1
      %p192 = por %p190, %p191
      %p193 = scmp.ne.s32.totalorder %s182, %s183
      %p194 = scmp.eq.s32.totalorder %s22, 0
      %p195 = por %p193, %p194
      %p196 = scmp.ne.s32.totalorder %s182, %s183
      %p197 = scmp.eq.s32.totalorder %s23, 1
      %p198 = por %p196, %p197
      %p200 = scmp.ne.s32.totalorder %s183, %s199
      %p201 = scmp.eq.s32.totalorder %s23, 0
      %p202 = por %p200, %p201
      %p203 = scmp.le.s32.totalorder 1, %s17
      %p204 = scmp.lt.s32.totalorder %s17, 3
      %p205 = pnand %p203, %p204
      %p206 = pneg %p205
      // Predicated region
      $region9: #{_tag_lm_head_jit.1} parent=5 // pred_check
        _
      $region10: #{_tag_lm_head_jit.1} parent=5 // pred_check_branch
        %208 = sbr.rel (%p205) target = $region12
      $region11: #{_tag_lm_head_jit.1} parent=5 // pred_region
        %s209 = ssub.s32 %s17, 1
        // Predicated region
        $region13: #{_tag_lm_head_jit.1} parent=11 // pred_check
          %p210 = pneg %p64
        $region14: #{_tag_lm_head_jit.1} parent=11 // pred_check_branch
          %212 = sbr.rel (%p210) target = $region16
        $region15: #{_tag_lm_head_jit.1} parent=11 // pred_region
          %214 = vsyncadd [#allocation5], 0
          %s215 = sshll.u32 %s1, 4
          %s216 = int_to_ptr.hbm [resolvable:$true] %s215
          %s217 = sshll.u32 [#allocation4], 4
          %s218 = int_to_ptr.vmem [resolvable:$true] %s217
          %223 = dma.hbm_to_vmem [thread:$0]  %s216, 256, %s218, [#allocation5], 64, 64, 4
        $region16: #{_tag_lm_head_jit.1} parent=11 // pred_fallthru
          _
        // Predicated region
        $region17: #{_tag_lm_head_jit.1} parent=11 // pred_check
          %p224 = pneg %p85
        $region18: #{_tag_lm_head_jit.1} parent=11 // pred_check_branch
          %226 = sbr.rel (%p224) target = $region20
        $region19: #{_tag_lm_head_jit.1} parent=11 // pred_region
          _
        $region20: #{_tag_lm_head_jit.1} parent=11 // pred_fallthru
          _
        // Predicated region
        $region21: #{_tag_lm_head_jit.1} parent=11 // pred_check
          %p227 = pneg %p106
        $region22: #{_tag_lm_head_jit.1} parent=11 // pred_check_branch
          %229 = sbr.rel (%p227) target = $region24
        $region23: #{_tag_lm_head_jit.1} parent=11 // pred_region
          _
        $region24: #{_tag_lm_head_jit.1} parent=11 // pred_fallthru
          _
        // Predicated region
        $region25: #{_tag_lm_head_jit.1} parent=11 // pred_check
          %p230 = pneg %p127
        $region26: #{_tag_lm_head_jit.1} parent=11 // pred_check_branch
          %232 = sbr.rel (%p230) target = $region28
        $region27: #{_tag_lm_head_jit.1} parent=11 // pred_region
          _
        $region28: #{_tag_lm_head_jit.1} parent=11 // pred_fallthru
          _
        // Predicated region
        $region29: #{_tag_lm_head_jit.1} parent=11 // pred_check
          %p233 = pneg %p148
        $region30: #{_tag_lm_head_jit.1} parent=11 // pred_check_branch
          %235 = sbr.rel (%p233) target = $region32
        $region31: #{_tag_lm_head_jit.1} parent=11 // pred_region
          %237 = vsyncadd [#allocation5], 0
          %s238 = sshll.u32 %s5, 4
          %s239 = int_to_ptr.hbm [resolvable:$true] %s238
          %s240 = sshll.u32 [#allocation6], 4
          %s241 = int_to_ptr.vmem [resolvable:$true] %s240
          %246 = dma.hbm_to_vmem [thread:$0]  %s239, 256, %s241, [#allocation5], 64, 64, 4
        $region32: #{_tag_lm_head_jit.1} parent=11 // pred_fallthru
          _
        // Predicated region
        $region33: #{_tag_lm_head_jit.1} parent=11 // pred_check
          %p247 = pneg %p169
        $region34: #{_tag_lm_head_jit.1} parent=11 // pred_check_branch
          %249 = sbr.rel (%p247) target = $region36
        $region35: #{_tag_lm_head_jit.1} parent=11 // pred_region
          _
        $region36: #{_tag_lm_head_jit.1} parent=11 // pred_fallthru
          _
      $region12: #{_tag_lm_head_jit.1} parent=5 // pred_fallthru
        _
      %p250 = scmp.lt.s32.totalorder %s17, 2
      // Predicated region
      $region37: #{_tag_lm_head_jit.1} parent=5 // pred_check
        %p251 = pneg %p250
      $region38: #{_tag_lm_head_jit.1} parent=5 // pred_check_branch
        %253 = sbr.rel (%p251) target = $region40
      $region39: #{_tag_lm_head_jit.1} parent=5 // pred_region
        // Predicated region
        $region41: #{_tag_lm_head_jit.1} parent=39 // pred_check
          %p254 = pneg %p37
        $region42: #{_tag_lm_head_jit.1} parent=39 // pred_check_branch
          %256 = sbr.rel (%p254) target = $region44
        $region43: #{_tag_lm_head_jit.1} parent=39 // pred_region
          %s257 = sand.u32 %s27, 1
          %s258 = scalar_lea.sflag [#allocation3], %s257
          %s259 = sand.u32 %s27, 1
          %s260 = smul.addr %s259, 8
          %s261 = scalar_lea.vmem [#allocation2], %s260
          %263 = vsyncadd %s258, 0
          %s264 = smul.addr %s17, 8
          %s265 = scalar_lea.hbm %s0, %s264
          %s267 = sshll.u32 %s265, 4
          %s268 = int_to_ptr.hbm [resolvable:$true] %s267
          %s269 = sshll.u32 %s261, 4
          %s270 = int_to_ptr.vmem [resolvable:$true] %s269
          %272 = dma.hbm_to_vmem [thread:$0]  %s268, 128, %s270, %s258
        $region44: #{_tag_lm_head_jit.1} parent=39 // pred_fallthru
          _
      $region40: #{_tag_lm_head_jit.1} parent=5 // pred_fallthru
        _
      %p273 = scmp.le.s32.totalorder 1, %s17
      %p274 = scmp.lt.s32.totalorder %s17, 3
      %p275 = pnand %p273, %p274
      %p276 = pneg %p275
      // Predicated region
      $region45: #{_tag_lm_head_jit.1} parent=5 // pred_check
        _
      $region46: #{_tag_lm_head_jit.1} parent=5 // pred_check_branch
        %278 = sbr.rel (%p275) target = $region48
      $region47: #{_tag_lm_head_jit.1} parent=5 // pred_region
        %s279 = ssub.s32 %s17, 1
        %s280 = sand.u32 %s30, 1
        %s281 = scalar_lea.sflag [#allocation3], %s280
        %s282 = sand.u32 %s30, 1
        %s283 = smul.addr %s282, 8
        %s284 = scalar_lea.vmem [#allocation2], %s283
        // Predicated region
        $region49: #{_tag_lm_head_jit.1} parent=47 // pred_check
          %p285 = pneg %p43
        $region50: #{_tag_lm_head_jit.1} parent=47 // pred_check_branch
          %287 = sbr.rel (%p285) target = $region52
        $region51: #{_tag_lm_head_jit.1} parent=47 // pred_region
          %289 = dma.done %s281, 128
        $region52: #{_tag_lm_head_jit.1} parent=47 // pred_fallthru
          _
        // Predicated region
        $region53: #{_tag_lm_head_jit.1} parent=47 // pred_check
          %p290 = pneg %p64
        $region54: #{_tag_lm_head_jit.1} parent=47 // pred_check_branch
          %292 = sbr.rel (%p290) target = $region56
        $region55: #{_tag_lm_head_jit.1} parent=47 // pred_region
          %294 = dma.done [#allocation5], 256
        $region56: #{_tag_lm_head_jit.1} parent=47 // pred_fallthru
          _
        // Predicated region
        $region57: #{_tag_lm_head_jit.1} parent=47 // pred_check
          %p295 = pneg %p148
        $region58: #{_tag_lm_head_jit.1} parent=47 // pred_check_branch
          %297 = sbr.rel (%p295) target = $region60
        $region59: #{_tag_lm_head_jit.1} parent=47 // pred_region
          %299 = dma.done [#allocation5], 256
        $region60: #{_tag_lm_head_jit.1} parent=47 // pred_fallthru
          _
        %s300 = sand.u32 %s30, 1
        %s301 = scalar_lea.sflag [#allocation3], %s300
        %s302 = sand.u32 %s30, 1
        %s303 = smul.addr %s302, 8
        %s304 = scalar_lea.vmem [#allocation2], %s303
        %p305 = pneg %p43
        %p306 = pneg %p40
        %p307 = pneg %p64
        %p308 = pneg %p61
        %p309 = pneg %p85
        %p310 = pneg %p82
        %p311 = pneg %p106
        %p312 = pneg %p103
        %p313 = pneg %p127
        %p314 = pneg %p124
        %p315 = pneg %p148
        %p316 = pneg %p145
        %p317 = pneg %p169
        %p318 = pneg %p166
        %p319 = pneg %p195
        %p320 = pneg %p192
        %p321 = scmp.lt.s32.totalorder %s22, 1
        %s322 = scalar_select %p321, %s22, 1
        %s323 = smul.addr %s322, 8
        %s324 = scalar_lea.vmem %s7, %s323
        %p325 = scmp.lt.s32.totalorder %s22, 1
        %s326 = scalar_select %p325, %s22, 1
        %s327 = smul.addr %s326, 8
        %s328 = scalar_lea.vmem %s7, %s327
        %v330 = vld [vmem:[%s284] sm:$0xff]
        %v331 = vpack.c.bf16 %v330, %v330
        %v332 = vld [vmem:[#allocation4] sm:$0xf]
        %v333 = vld [vmem:[#allocation4 + $0x4] sm:$0xf]
        %v334 = vld [vmem:[#allocation4 + $0x8] sm:$0xf]
        %v335 = vld [vmem:[#allocation4 + $0xc] sm:$0xf]
        %v336 = vld [vmem:[%s2] sm:$0x1]
        %v338 = vperm.slane %v336, 0
        %v344 = vunpack.c.l.b16 %v332
        %v345 = vunpack.c.l.b16 %v333
        %v346 = vunpack.c.l.b16 %v334
        %v347 = vunpack.c.l.b16 %v335
        %v348 = vpack.c.b16 %v345, %v344
        %v349 = vpack.c.b16 %v347, %v346
        %vm352 = vcmask 261120
        %v354 = vsel %vm352, %v331, 0
        %356 = vmatpush.bf16.msra.mxu0 0
        %357 = vmatpush.bf16.msra.mxu0 0
        %358 = vmatpush.bf16.msra.mxu0 0
        %359 = vmatpush.bf16.msra.mxu0 0
        %360 = vmatpush.bf16.msra.mxu0 0
        %361 = vmatpush.bf16.msra.mxu0 0
        %362 = vmatpush.bf16.msra.mxu0 %v349
        %363 = vmatpush.bf16.msra.mxu0 %v348
        %364 = vmatmul.bf16.gmra.mxu0 %v354
        %v365 = vpop.f32.mrf.mxu0
        %v366 = vadd.f32 %v338, %v365
        %v367 = vpop.f32.mrf.mxu0
        %368 = vdwg.mxu0
        %v369 = vmul.f32 %v366, 0.5
        %v370 = vmul.f32 %v366, 0.044715
        %v371 = vmul.f32 %v370, %v366
        %v372 = vmul.f32 %v371, %v366
        %v373 = vadd.f32 %v366, %v372
        %v374 = vmul.f32 %v373, 0.7978846
        %v375 = vtanh.pop %v374
        %v376 = vadd.f32 %v375, 1.0
        %v377 = vmul.f32 %v369, %v376
        %v378 = vsel %vm352, %v377, 0.0
        %379 = vadd.xlane.f32.xlu0 %v378
        %v380 = vpop.xlane.xlu0 %379
        %v381 = vrcp.pop 32.0
        %v382 = vmul.f32 32.0, %v381
        %v383 = vsub.f32 1.0, %v382
        %v384 = vmul.f32 %v381, %v383
        %v385 = vadd.f32 %v381, %v384
        %vm386 = vweird.f32 %v381
        %v387 = vsel %vm386, %v381, %v385
        %v388 = vmul.f32 %v380, %v387
        %v389 = vsub.f32 %v377, %v388
        %v390 = vmul.f32 %v389, %v389
        %v391 = vsel %vm352, %v390, 0.0
        %392 = vadd.xlane.f32.xlu0 %v391
        %v393 = vpop.xlane.xlu0 %392
        %v394 = vmul.f32 %v393, %v387
        %v395 = vadd.f32 %v394, 1e-12
        %v396 = vrsqrt.pop %v395
        %v397 = vmul.f32 %v396, %v395
        %v398 = vmul.f32 %v397, %v396
        %v399 = vmul.f32 0.5, %v398
        %v400 = vsub.f32 1.5, %v399
        %v401 = vmul.f32 %v396, %v400
        %vm402 = vweird.f32 %v395
        %vm403 = vweird.f32 %v396
        %vm404 = vmor %vm402, %vm403
        %v405 = vsel %vm404, %v396, %v401
        %v406 = vmul.f32 %v389, %v405
        %v407 = vld [vmem:[%s3] sm:$0x1]
        %v409 = vperm.slane %v407, 0
        %v411 = vmul.f32 %v406, %v409
        %v412 = vld [vmem:[%s4] sm:$0x1]
        %v414 = vperm.slane %v412, 0
        %v416 = vadd.f32 %v411, %v414
        %v417 = vpack.c.bf16 %v416, %v416
        %v418 = vld [vmem:[#allocation6] sm:$0xf]
        %v419 = vld [vmem:[#allocation6 + $0x4] sm:$0xf]
        %v420 = vld [vmem:[#allocation6 + $0x8] sm:$0xf]
        %v421 = vld [vmem:[#allocation6 + $0xc] sm:$0xf]
        %v422 = vld [vmem:[%s6] sm:$0x1]
        %v424 = vperm.slane %v422, 0
        %v430 = vunpack.c.l.b16 %v418
        %v431 = vunpack.c.l.b16 %v419
        %v432 = vunpack.c.l.b16 %v420
        %v433 = vunpack.c.l.b16 %v421
        %v434 = vpack.c.b16 %v431, %v430
        %v435 = vpack.c.b16 %v433, %v432
        %v439 = vsel %vm352, %v417, 0
        %441 = vmatpush.bf16.msra.mxu0 0
        %442 = vmatpush.bf16.msra.mxu0 0
        %443 = vmatpush.bf16.msra.mxu0 0
        %444 = vmatpush.bf16.msra.mxu0 0
        %445 = vmatpush.bf16.msra.mxu0 0
        %446 = vmatpush.bf16.msra.mxu0 0
        %447 = vmatpush.bf16.msra.mxu0 %v435
        %448 = vmatpush.bf16.msra.mxu0 %v434
        %449 = vmatmul.bf16.gmra.mxu0 %v439
        %v450 = vpop.f32.mrf.mxu0
        %v451 = vadd.f32 %v424, %v450
        %v452 = vpop.f32.mrf.mxu0
        %453 = vdwg.mxu0
        %454 = vst [vmem:[%s328] sm:$0xff] %v451
        %p455 = scmp.lt.s32.totalorder %s22, 1
        %s456 = scalar_select %p455, %s22, 1
        %s457 = smul.addr %s456, 8
        %s458 = scalar_lea.vmem %s7, %s457
        // Predicated region
        $region61: #{_tag_lm_head_jit.1} parent=47 // pred_check
          %p459 = pneg %p192
        $region62: #{_tag_lm_head_jit.1} parent=47 // pred_check_branch
          %461 = sbr.rel (%p459) target = $region64
        $region63: #{_tag_lm_head_jit.1} parent=47 // pred_region
          _
        $region64: #{_tag_lm_head_jit.1} parent=47 // pred_fallthru
          _
      $region48: #{_tag_lm_head_jit.1} parent=5 // pred_fallthru
        _
      %p462 = scmp.le.s32.totalorder 2, %s17
      // Predicated region
      $region65: #{_tag_lm_head_jit.1} parent=5 // pred_check
        %p463 = pneg %p462
      $region66: #{_tag_lm_head_jit.1} parent=5 // pred_check_branch
        %465 = sbr.rel (%p463) target = $region68
      $region67: #{_tag_lm_head_jit.1} parent=5 // pred_region
        %s466 = ssub.s32 %s17, 2
        // Predicated region
        $region69: #{_tag_lm_head_jit.1} parent=67 // pred_check
          %p467 = pneg %p198
        $region70: #{_tag_lm_head_jit.1} parent=67 // pred_check_branch
          %469 = sbr.rel (%p467) target = $region72
        $region71: #{_tag_lm_head_jit.1} parent=67 // pred_region
          %p470 = scmp.lt.s32.totalorder %s23, 1
          %s471 = scalar_select %p470, %s23, 1
          %s472 = smul.addr %s471, 8
          %s473 = scalar_lea.vmem %s7, %s472
        $region72: #{_tag_lm_head_jit.1} parent=67 // pred_fallthru
          _
      $region68: #{_tag_lm_head_jit.1} parent=5 // pred_fallthru
        _
    $region6: #{_tag_lm_head_jit.1} parent=1 // loop_footer
      %s21 = sadd.s32 1, %s17
    $region7: #{_tag_lm_head_jit.1} parent=1 // loop_footer_branch
      %16 = sbr.rel target = $region3
    $region8: #{_tag_lm_head_jit.1} parent=1 // loop_exit
      _
    %474 = vsyncpa [#allocation3], 1
    %s475 = scalar_lea.sflag [#allocation3], 1
    %476 = vsyncpa %s475, 1
    %477 = vsyncpa [#allocation5], 1

// kernel: _tag_lm_head_jit.1
$region0: #{_tag_lm_head_jit.1}
  #allocation0 [shape = 'u32[]', space=smem, size = 0x4, offset = 0x4, fixed_abs, tag = 'smem constant byte address 0x4 - core index']
  #allocation1 [shape = 'u32[72,128]{1,0:T(1,128)}', space=vmem, size = 0x9000, scoped, tag = 'internal scratch']
  %s0 = inlined_call_operand.hbm [shape: f32[16,32], index: 0, kind: input, shape index: {}]
  %s1 = inlined_call_operand.hbm [shape: bf16[32,32], index: 1, kind: input, shape index: {}]
  %s2 = inlined_call_operand.vmem [shape: f32[1,32], index: 2, kind: input, shape index: {}]
  %s3 = inlined_call_operand.vmem [shape: f32[1,32], index: 3, kind: input, shape index: {}]
  %s4 = inlined_call_operand.vmem [shape: f32[1,32], index: 4, kind: input, shape index: {}]
  %s5 = inlined_call_operand.hbm [shape: bf16[32,128], index: 5, kind: input, shape index: {}]
  %s6 = inlined_call_operand.vmem [shape: f32[1,128], index: 6, kind: input, shape index: {}]
  %s7 = inlined_call_operand.vmem [shape: f32[16,128], index: 7, kind: output, shape index: {}]
  %s8 = sld [smem:[#allocation0]]
  $region73: #{_tag_lm_head_jit.1} parent=0
    _
  %s10 = ssub.s32 1, %s8
  %s11 = scalar_select 0, %s10, %s8
  $region1: #{_tag_lm_head_jit.1} parent=0
    #allocation2 [shape = 'u8[8192]{0}', space=vmem, size = 0x2000, scoped, tag = 'input window, operand 0']
    #allocation3 [shape = 's32[2]{0}', space=sflag, size = 0x8, scoped, tag = 'scoped memory for _tag_lm_head_jit.1']
    #allocation4 [shape = 'u8[8192]{0}', space=vmem, size = 0x2000, scoped, tag = 'input window, operand 1, single buffered']
    #allocation5 [shape = 's32[1]{0}', space=sflag, size = 0x4, scoped, tag = 'scoped memory for _tag_lm_head_jit.1']
    #allocation6 [shape = 'u8[8192]{0}', space=vmem, size = 0x2000, scoped, tag = 'input window, operand 5, single buffered']
    %12 = vsyncpa [#allocation3], 0
    %s13 = scalar_lea.sflag [#allocation3], 1
    %14 = vsyncpa %s13, 0
    %15 = vsyncpa [#allocation5], 0
    loop: start=0, step=1, limit=4
    $region2: #{_tag_lm_head_jit.1} parent=1 // loop_pre_header
      _
    $region3: #{_tag_lm_head_jit.1} parent=1 // loop_header
      %s17 = sphi 0, %s21
      %p18 = scmp.ge.s32.totalorder %s17, 4
      %s27 = sphi 0, %s29
      %s30 = sphi 0, %s27
      %s31 = sphi 0, %s30
      %s47 = sphi 0, %s31
      %s51 = sphi 0, %s51
      %s53 = sphi 0, %s51
      %s54 = sphi 0, %s53
      %s68 = sphi 0, %s54
      %s72 = sphi 0, %s72
      %s74 = sphi 0, %s72
      %s75 = sphi 0, %s74
      %s89 = sphi 0, %s75
      %s93 = sphi 0, %s93
      %s95 = sphi 0, %s93
      %s96 = sphi 0, %s95
      %s110 = sphi 0, %s96
      %s114 = sphi 0, %s114
      %s116 = sphi 0, %s114
      %s117 = sphi 0, %s116
      %s131 = sphi 0, %s117
      %s135 = sphi 0, %s135
      %s137 = sphi 0, %s135
      %s138 = sphi 0, %s137
      %s152 = sphi 0, %s138
      %s156 = sphi 0, %s156
      %s158 = sphi 0, %s156
      %s159 = sphi 0, %s158
      %s173 = sphi 0, %s159
      %s179 = sphi 0, %s181
      %s182 = sphi 0, %s179
      %s183 = sphi 0, %s182
      %s199 = sphi 0, %s183
    $region4: #{_tag_lm_head_jit.1} parent=1 // loop_header_branch
      %20 = sbr.rel (%p18) target = $region8
    $region5: #{_tag_lm_head_jit.1} parent=1 // loop_body
      %s22 = ssub.s32 %s17, 1
      %s23 = ssub.s32 %s17, 2
      %s24 = sadd.s32 %s17, 1
      %s25 = ssub.s32 %s17, %s24
      %p26 = scmp.eq.s32.totalorder %s25, 0
      %s28 = sadd.s32 %s27, 1
      %s29 = scalar_select %p26, %s27, %s28
      %p32 = pneg %p26
      %p33 = scmp.eq.s32.totalorder %s17, 1
      %p34 = por %p32, %p33
      %p35 = scmp.ne.s32.totalorder %s27, %s30
      %p36 = scmp.eq.s32.totalorder %s17, 0
      %p37 = por %p35, %p36
      %p38 = scmp.ne.s32.totalorder %s27, %s30
      %p39 = scmp.eq.s32.totalorder %s22, 1
      %p40 = por %p38, %p39
      %p41 = scmp.ne.s32.totalorder %s30, %s31
      %p42 = scmp.eq.s32.totalorder %s22, 0
      %p43 = por %p41, %p42
      %p44 = scmp.ne.s32.totalorder %s30, %s31
      %p45 = scmp.eq.s32.totalorder %s23, 1
      %p46 = por %p44, %p45
      %p48 = scmp.ne.s32.totalorder %s31, %s47
      %p49 = scmp.eq.s32.totalorder %s23, 0
      %p50 = por %p48, %p49
      %s52 = sadd.s32 %s51, 1
      %p55 = scmp.eq.s32.totalorder %s17, 1
      %p56 = scmp.ne.s32.totalorder %s51, %s53
      %p57 = scmp.eq.s32.totalorder %s17, 0
      %p58 = por %p56, %p57
      %p59 = scmp.ne.s32.totalorder %s51, %s53
      %p60 = scmp.eq.s32.totalorder %s22, 1
      %p61 = por %p59, %p60
      %p62 = scmp.ne.s32.totalorder %s53, %s54
      %p63 = scmp.eq.s32.totalorder %s22, 0
      %p64 = por %p62, %p63
      %p65 = scmp.ne.s32.totalorder %s53, %s54
      %p66 = scmp.eq.s32.totalorder %s23, 1
      %p67 = por %p65, %p66
      %p69 = scmp.ne.s32.totalorder %s54, %s68
      %p70 = scmp.eq.s32.totalorder %s23, 0
      %p71 = por %p69, %p70
      %s73 = sadd.s32 %s72, 1
      %p76 = scmp.eq.s32.totalorder %s17, 1
      %p77 = scmp.ne.s32.totalorder %s72, %s74
      %p78 = scmp.eq.s32.totalorder %s17, 0
      %p79 = por %p77, %p78
      %p80 = scmp.ne.s32.totalorder %s72, %s74
      %p81 = scmp.eq.s32.totalorder %s22, 1
      %p82 = por %p80, %p81
      %p83 = scmp.ne.s32.totalorder %s74, %s75
      %p84 = scmp.eq.s32.totalorder %s22, 0
      %p85 = por %p83, %p84
      %p86 = scmp.ne.s32.totalorder %s74, %s75
      %p87 = scmp.eq.s32.totalorder %s23, 1
      %p88 = por %p86, %p87
      %p90 = scmp.ne.s32.totalorder %s75, %s89
      %p91 = scmp.eq.s32.totalorder %s23, 0
      %p92 = por %p90, %p91
      %s94 = sadd.s32 %s93, 1
      %p97 = scmp.eq.s32.totalorder %s17, 1
      %p98 = scmp.ne.s32.totalorder %s93, %s95
      %p99 = scmp.eq.s32.totalorder %s17, 0
      %p100 = por %p98, %p99
      %p101 = scmp.ne.s32.totalorder %s93, %s95
      %p102 = scmp.eq.s32.totalorder %s22, 1
      %p103 = por %p101, %p102
      %p104 = scmp.ne.s32.totalorder %s95, %s96
      %p105 = scmp.eq.s32.totalorder %s22, 0
      %p106 = por %p104, %p105
      %p107 = scmp.ne.s32.totalorder %s95, %s96
      %p108 = scmp.eq.s32.totalorder %s23, 1
      %p109 = por %p107, %p108
      %p111 = scmp.ne.s32.totalorder %s96, %s110
      %p112 = scmp.eq.s32.totalorder %s23, 0
      %p113 = por %p111, %p112
      %s115 = sadd.s32 %s114, 1
      %p118 = scmp.eq.s32.totalorder %s17, 1
      %p119 = scmp.ne.s32.totalorder %s114, %s116
      %p120 = scmp.eq.s32.totalorder %s17, 0
      %p121 = por %p119, %p120
      %p122 = scmp.ne.s32.totalorder %s114, %s116
      %p123 = scmp.eq.s32.totalorder %s22, 1
      %p124 = por %p122, %p123
      %p125 = scmp.ne.s32.totalorder %s116, %s117
      %p126 = scmp.eq.s32.totalorder %s22, 0
      %p127 = por %p125, %p126
      %p128 = scmp.ne.s32.totalorder %s116, %s117
      %p129 = scmp.eq.s32.totalorder %s23, 1
      %p130 = por %p128, %p129
      %p132 = scmp.ne.s32.totalorder %s117, %s131
      %p133 = scmp.eq.s32.totalorder %s23, 0
      %p134 = por %p132, %p133
      %s136 = sadd.s32 %s135, 1
      %p139 = scmp.eq.s32.totalorder %s17, 1
      %p140 = scmp.ne.s32.totalorder %s135, %s137
      %p141 = scmp.eq.s32.totalorder %s17, 0
      %p142 = por %p140, %p141
      %p143 = scmp.ne.s32.totalorder %s135, %s137
      %p144 = scmp.eq.s32.totalorder %s22, 1
      %p145 = por %p143, %p144
      %p146 = scmp.ne.s32.totalorder %s137, %s138
      %p147 = scmp.eq.s32.totalorder %s22, 0
      %p148 = por %p146, %p147
      %p149 = scmp.ne.s32.totalorder %s137, %s138
      %p150 = scmp.eq.s32.totalorder %s23, 1
      %p151 = por %p149, %p150
      %p153 = scmp.ne.s32.totalorder %s138, %s152
      %p154 = scmp.eq.s32.totalorder %s23, 0
      %p155 = por %p153, %p154
      %s157 = sadd.s32 %s156, 1
      %p160 = scmp.eq.s32.totalorder %s17, 1
      %p161 = scmp.ne.s32.totalorder %s156, %s158
      %p162 = scmp.eq.s32.totalorder %s17, 0
      %p163 = por %p161, %p162
      %p164 = scmp.ne.s32.totalorder %s156, %s158
      %p165 = scmp.eq.s32.totalorder %s22, 1
      %p166 = por %p164, %p165
      %p167 = scmp.ne.s32.totalorder %s158, %s159
      %p168 = scmp.eq.s32.totalorder %s22, 0
      %p169 = por %p167, %p168
      %p170 = scmp.ne.s32.totalorder %s158, %s159
      %p171 = scmp.eq.s32.totalorder %s23, 1
      %p172 = por %p170, %p171
      %p174 = scmp.ne.s32.totalorder %s159, %s173
      %p175 = scmp.eq.s32.totalorder %s23, 0
      %p176 = por %p174, %p175
      %s177 = ssub.s32 %s17, %s24
      %p178 = scmp.eq.s32.totalorder %s177, 0
      %s180 = sadd.s32 %s179, 1
      %s181 = scalar_select %p178, %s179, %s180
      %p184 = pneg %p178
      %p185 = scmp.eq.s32.totalorder %s17, 1
      %p186 = por %p184, %p185
      %p187 = scmp.ne.s32.totalorder %s179, %s182
      %p188 = scmp.eq.s32.totalorder %s17, 0
      %p189 = por %p187, %p188
      %p190 = scmp.ne.s32.totalorder %s179, %s182
      %p191 = scmp.eq.s32.totalorder %s22, 1
      %p192 = por %p190, %p191
      %p193 = scmp.ne.s32.totalorder %s182, %s183
      %p194 = scmp.eq.s32.totalorder %s22, 0
      %p195 = por %p193, %p194
      %p196 = scmp.ne.s32.totalorder %s182, %s183
      %p197 = scmp.eq.s32.totalorder %s23, 1
      %p198 = por %p196, %p197
      %p200 = scmp.ne.s32.totalorder %s183, %s199
      %p201 = scmp.eq.s32.totalorder %s23, 0
      %p202 = por %p200, %p201
      %p203 = scmp.le.s32.totalorder 1, %s17
      %p204 = scmp.lt.s32.totalorder %s17, 3
      %p205 = pnand %p203, %p204
      %p206 = pneg %p205
      // Predicated region
      $region9: #{_tag_lm_head_jit.1} parent=5 // pred_check
        _
      $region10: #{_tag_lm_head_jit.1} parent=5 // pred_check_branch
        %208 = sbr.rel (%p205) target = $region12
      $region11: #{_tag_lm_head_jit.1} parent=5 // pred_region
        %s209 = ssub.s32 %s17, 1
        // Predicated region
        $region13: #{_tag_lm_head_jit.1} parent=11 // pred_check
          %p210 = pneg %p64
        $region14: #{_tag_lm_head_jit.1} parent=11 // pred_check_branch
          %212 = sbr.rel (%p210) target = $region16
        $region15: #{_tag_lm_head_jit.1} parent=11 // pred_region
          %214 = vsyncadd [#allocation5], 0
          %s215 = sshll.u32 %s1, 4
          %s216 = int_to_ptr.hbm [resolvable:$true] %s215
          %s217 = sshll.u32 [#allocation4], 4
          %s218 = int_to_ptr.vmem [resolvable:$true] %s217
          %223 = dma.hbm_to_vmem [thread:$0]  %s216, 256, %s218, [#allocation5], 64, 64, 4
        $region16: #{_tag_lm_head_jit.1} parent=11 // pred_fallthru
          _
        // Predicated region
        $region17: #{_tag_lm_head_jit.1} parent=11 // pred_check
          %p224 = pneg %p85
        $region18: #{_tag_lm_head_jit.1} parent=11 // pred_check_branch
          %226 = sbr.rel (%p224) target = $region20
        $region19: #{_tag_lm_head_jit.1} parent=11 // pred_region
          _
        $region20: #{_tag_lm_head_jit.1} parent=11 // pred_fallthru
          _
        // Predicated region
        $region21: #{_tag_lm_head_jit.1} parent=11 // pred_check
          %p227 = pneg %p106
        $region22: #{_tag_lm_head_jit.1} parent=11 // pred_check_branch
          %229 = sbr.rel (%p227) target = $region24
        $region23: #{_tag_lm_head_jit.1} parent=11 // pred_region
          _
        $region24: #{_tag_lm_head_jit.1} parent=11 // pred_fallthru
          _
        // Predicated region
        $region25: #{_tag_lm_head_jit.1} parent=11 // pred_check
          %p230 = pneg %p127
        $region26: #{_tag_lm_head_jit.1} parent=11 // pred_check_branch
          %232 = sbr.rel (%p230) target = $region28
        $region27: #{_tag_lm_head_jit.1} parent=11 // pred_region
          _
        $region28: #{_tag_lm_head_jit.1} parent=11 // pred_fallthru
          _
        // Predicated region
        $region29: #{_tag_lm_head_jit.1} parent=11 // pred_check
          %p233 = pneg %p148
        $region30: #{_tag_lm_head_jit.1} parent=11 // pred_check_branch
          %235 = sbr.rel (%p233) target = $region32
        $region31: #{_tag_lm_head_jit.1} parent=11 // pred_region
          %237 = vsyncadd [#allocation5], 0
          %s238 = sshll.u32 %s5, 4
          %s239 = int_to_ptr.hbm [resolvable:$true] %s238
          %s240 = sshll.u32 [#allocation6], 4
          %s241 = int_to_ptr.vmem [resolvable:$true] %s240
          %246 = dma.hbm_to_vmem [thread:$0]  %s239, 256, %s241, [#allocation5], 64, 64, 4
        $region32: #{_tag_lm_head_jit.1} parent=11 // pred_fallthru
          _
        // Predicated region
        $region33: #{_tag_lm_head_jit.1} parent=11 // pred_check
          %p247 = pneg %p169
        $region34: #{_tag_lm_head_jit.1} parent=11 // pred_check_branch
          %249 = sbr.rel (%p247) target = $region36
        $region35: #{_tag_lm_head_jit.1} parent=11 // pred_region
          _
        $region36: #{_tag_lm_head_jit.1} parent=11 // pred_fallthru
          _
      $region12: #{_tag_lm_head_jit.1} parent=5 // pred_fallthru
        _
      %p250 = scmp.lt.s32.totalorder %s17, 2
      // Predicated region
      $region37: #{_tag_lm_head_jit.1} parent=5 // pred_check
        %p251 = pneg %p250
      $region38: #{_tag_lm_head_jit.1} parent=5 // pred_check_branch
        %253 = sbr.rel (%p251) target = $region40
      $region39: #{_tag_lm_head_jit.1} parent=5 // pred_region
        // Predicated region
        $region41: #{_tag_lm_head_jit.1} parent=39 // pred_check
          %p254 = pneg %p37
        $region42: #{_tag_lm_head_jit.1} parent=39 // pred_check_branch
          %256 = sbr.rel (%p254) target = $region44
        $region43: #{_tag_lm_head_jit.1} parent=39 // pred_region
          %s257 = sand.u32 %s27, 1
          %s258 = scalar_lea.sflag [#allocation3], %s257
          %s259 = sand.u32 %s27, 1
          %s260 = smul.addr %s259, 8
          %s261 = scalar_lea.vmem [#allocation2], %s260
          %263 = vsyncadd %s258, 0
          %s264 = smul.addr %s17, 8
          %s265 = scalar_lea.hbm %s0, %s264
          %s267 = sshll.u32 %s265, 4
          %s268 = int_to_ptr.hbm [resolvable:$true] %s267
          %s269 = sshll.u32 %s261, 4
          %s270 = int_to_ptr.vmem [resolvable:$true] %s269
          %272 = dma.hbm_to_vmem [thread:$0]  %s268, 128, %s270, %s258
        $region44: #{_tag_lm_head_jit.1} parent=39 // pred_fallthru
          _
      $region40: #{_tag_lm_head_jit.1} parent=5 // pred_fallthru
        _
      %p273 = scmp.le.s32.totalorder 1, %s17
      %p274 = scmp.lt.s32.totalorder %s17, 3
      %p275 = pnand %p273, %p274
      %p276 = pneg %p275
      // Predicated region
      $region45: #{_tag_lm_head_jit.1} parent=5 // pred_check
        _
      $region46: #{_tag_lm_head_jit.1} parent=5 // pred_check_branch
        %278 = sbr.rel (%p275) target = $region48
      $region47: #{_tag_lm_head_jit.1} parent=5 // pred_region
        %s279 = ssub.s32 %s17, 1
        %s280 = sand.u32 %s30, 1
        %s281 = scalar_lea.sflag [#allocation3], %s280
        %s282 = sand.u32 %s30, 1
        %s283 = smul.addr %s282, 8
        %s284 = scalar_lea.vmem [#allocation2], %s283
        // Predicated region
        $region49: #{_tag_lm_head_jit.1} parent=47 // pred_check
          %p285 = pneg %p43
        $region50: #{_tag_lm_head_jit.1} parent=47 // pred_check_branch
          %287 = sbr.rel (%p285) target = $region52
        $region51: #{_tag_lm_head_jit.1} parent=47 // pred_region
          %289 = dma.done %s281, 128
        $region52: #{_tag_lm_head_jit.1} parent=47 // pred_fallthru
          _
        // Predicated region
        $region53: #{_tag_lm_head_jit.1} parent=47 // pred_check
          %p290 = pneg %p64
        $region54: #{_tag_lm_head_jit.1} parent=47 // pred_check_branch
          %292 = sbr.rel (%p290) target = $region56
        $region55: #{_tag_lm_head_jit.1} parent=47 // pred_region
          %294 = dma.done [#allocation5], 256
        $region56: #{_tag_lm_head_jit.1} parent=47 // pred_fallthru
          _
        // Predicated region
        $region57: #{_tag_lm_head_jit.1} parent=47 // pred_check
          %p295 = pneg %p148
        $region58: #{_tag_lm_head_jit.1} parent=47 // pred_check_branch
          %297 = sbr.rel (%p295) target = $region60
        $region59: #{_tag_lm_head_jit.1} parent=47 // pred_region
          %299 = dma.done [#allocation5], 256
        $region60: #{_tag_lm_head_jit.1} parent=47 // pred_fallthru
          _
        %s300 = sand.u32 %s30, 1
        %s301 = scalar_lea.sflag [#allocation3], %s300
        %s302 = sand.u32 %s30, 1
        %s303 = smul.addr %s302, 8
        %s304 = scalar_lea.vmem [#allocation2], %s303
        %p305 = pneg %p43
        %p306 = pneg %p40
        %p307 = pneg %p64
        %p308 = pneg %p61
        %p309 = pneg %p85
        %p310 = pneg %p82
        %p311 = pneg %p106
        %p312 = pneg %p103
        %p313 = pneg %p127
        %p314 = pneg %p124
        %p315 = pneg %p148
        %p316 = pneg %p145
        %p317 = pneg %p169
        %p318 = pneg %p166
        %p319 = pneg %p195
        %p320 = pneg %p192
        %p321 = scmp.lt.s32.totalorder %s22, 1
        %s322 = scalar_select %p321, %s22, 1
        %s323 = smul.addr %s322, 8
        %s324 = scalar_lea.vmem %s7, %s323
        %p325 = scmp.lt.s32.totalorder %s22, 1
        %s326 = scalar_select %p325, %s22, 1
        %s327 = smul.addr %s326, 8
        %s328 = scalar_lea.vmem %s7, %s327
        %v330 = vld [vmem:[%s284] sm:$0xff]
        %v331 = vpack.c.bf16 %v330, %v330
        %v332 = vld [vmem:[#allocation4] sm:$0xf]
        %v333 = vld [vmem:[#allocation4 + $0x4] sm:$0xf]
        %v334 = vld [vmem:[#allocation4 + $0x8] sm:$0xf]
        %v335 = vld [vmem:[#allocation4 + $0xc] sm:$0xf]
        %v336 = vld [vmem:[%s2] sm:$0x1]
        %v338 = vperm.slane %v336, 0
        %v344 = vunpack.c.l.b16 %v332
        %v345 = vunpack.c.l.b16 %v333
        %v346 = vunpack.c.l.b16 %v334
        %v347 = vunpack.c.l.b16 %v335
        %v348 = vpack.c.b16 %v345, %v344
        %v349 = vpack.c.b16 %v347, %v346
        %vm352 = vcmask 261120
        %v354 = vsel %vm352, %v331, 0
        %356 = vmatpush.bf16.msra.mxu0 0
        %357 = vmatpush.bf16.msra.mxu0 0
        %358 = vmatpush.bf16.msra.mxu0 0
        %359 = vmatpush.bf16.msra.mxu0 0
        %360 = vmatpush.bf16.msra.mxu0 0
        %361 = vmatpush.bf16.msra.mxu0 0
        %362 = vmatpush.bf16.msra.mxu0 %v349
        %363 = vmatpush.bf16.msra.mxu0 %v348
        %364 = vmatmul.bf16.gmra.mxu0 %v354
        %v365 = vpop.f32.mrf.mxu0
        %v366 = vadd.f32 %v338, %v365
        %v367 = vpop.f32.mrf.mxu0
        %368 = vdwg.mxu0
        %v369 = vmul.f32 %v366, 0.5
        %v370 = vmul.f32 %v366, 0.044715
        %v371 = vmul.f32 %v370, %v366
        %v372 = vmul.f32 %v371, %v366
        %v373 = vadd.f32 %v366, %v372
        %v374 = vmul.f32 %v373, 0.7978846
        %v375 = vtanh.pop %v374
        %v376 = vadd.f32 %v375, 1.0
        %v377 = vmul.f32 %v369, %v376
        %v378 = vsel %vm352, %v377, 0.0
        %379 = vadd.xlane.f32.xlu0 %v378
        %v380 = vpop.xlane.xlu0 %379
        %v381 = vrcp.pop 32.0
        %v382 = vmul.f32 32.0, %v381
        %v383 = vsub.f32 1.0, %v382
        %v384 = vmul.f32 %v381, %v383
        %v385 = vadd.f32 %v381, %v384
        %vm386 = vweird.f32 %v381
        %v387 = vsel %vm386, %v381, %v385
        %v388 = vmul.f32 %v380, %v387
        %v389 = vsub.f32 %v377, %v388
        %v390 = vmul.f32 %v389, %v389
        %v391 = vsel %vm352, %v390, 0.0
        %392 = vadd.xlane.f32.xlu0 %v391
        %v393 = vpop.xlane.xlu0 %392
        %v394 = vmul.f32 %v393, %v387
        %v395 = vadd.f32 %v394, 1e-12
        %v396 = vrsqrt.pop %v395
        %v397 = vmul.f32 %v396, %v395
        %v398 = vmul.f32 %v397, %v396
        %v399 = vmul.f32 0.5, %v398
        %v400 = vsub.f32 1.5, %v399
        %v401 = vmul.f32 %v396, %v400
        %vm402 = vweird.f32 %v395
        %vm403 = vweird.f32 %v396
        %vm404 = vmor %vm402, %vm403
        %v405 = vsel %vm404, %v396, %v401
        %v406 = vmul.f32 %v389, %v405
        %v407 = vld [vmem:[%s3] sm:$0x1]
        %v409 = vperm.slane %v407, 0
        %v411 = vmul.f32 %v406, %v409
        %v412 = vld [vmem:[%s4] sm:$0x1]
        %v414 = vperm.slane %v412, 0
        %v416 = vadd.f32 %v411, %v414
        %v417 = vpack.c.bf16 %v416, %v416
        %v418 = vld [vmem:[#allocation6] sm:$0xf]
        %v419 = vld [vmem:[#allocation6 + $0x4] sm:$0xf]
        %v420 = vld [vmem:[#allocation6 + $0x8] sm:$0xf]
        %v421 = vld [vmem:[#allocation6 + $0xc] sm:$0xf]
        %v422 = vld [vmem:[%s6] sm:$0x1]
        %v424 = vperm.slane %v422, 0
        %v430 = vunpack.c.l.b16 %v418
        %v431 = vunpack.c.l.b16 %v419
        %v432 = vunpack.c.l.b16 %v420
        %v433 = vunpack.c.l.b16 %v421
        %v434 = vpack.c.b16 %v431, %v430
        %v435 = vpack.c.b16 %v433, %v432
        %v439 = vsel %vm352, %v417, 0
        %441 = vmatpush.bf16.msra.mxu0 0
        %442 = vmatpush.bf16.msra.mxu0 0
        %443 = vmatpush.bf16.msra.mxu0 0
        %444 = vmatpush.bf16.msra.mxu0 0
        %445 = vmatpush.bf16.msra.mxu0 0
        %446 = vmatpush.bf16.msra.mxu0 0
        %447 = vmatpush.bf16.msra.mxu0 %v435
        %448 = vmatpush.bf16.msra.mxu0 %v434
        %449 = vmatmul.bf16.gmra.mxu0 %v439
        %v450 = vpop.f32.mrf.mxu0
        %v451 = vadd.f32 %v424, %v450
        %v452 = vpop.f32.mrf.mxu0
        %453 = vdwg.mxu0
        %454 = vst [vmem:[%s328] sm:$0xff] %v451
        %p455 = scmp.lt.s32.totalorder %s22, 1
        %s456 = scalar_select %p455, %s22, 1
        %s457 = smul.addr %s456, 8
        %s458 = scalar_lea.vmem %s7, %s457
        // Predicated region
        $region61: #{_tag_lm_head_jit.1} parent=47 // pred_check
          %p459 = pneg %p192
        $region62: #{_tag_lm_head_jit.1} parent=47 // pred_check_branch
          %461 = sbr.rel (%p459) target = $region64
        $region63: #{_tag_lm_head_jit.1} parent=47 // pred_region
          _
        $region64: #{_tag_lm_head_jit.1} parent=47 // pred_fallthru
          _
      $region48: #{_tag_lm_head_jit.1} parent=5 // pred_fallthru
        _
      %p462 = scmp.le.s32.totalorder 2, %s17
      // Predicated region
      $region65: #{_tag_lm_head_jit.1} parent=5 // pred_check
        %p463 = pneg %p462
      $region66: #{_tag_lm_head_jit.1} parent=5 // pred_check_branch
        %465 = sbr.rel (%p463) target = $region68
      $region67: #{_tag_lm_head_jit.1} parent=5 // pred_region
        %s466 = ssub.s32 %s17, 2
        // Predicated region
        $region69: #{_tag_lm_head_jit.1} parent=67 // pred_check
          %p467 = pneg %p198
        $region70: #{_tag_lm_head_jit.1} parent=67 // pred_check_branch
          %469 = sbr.rel (%p467) target = $region72
        $region71: #{_tag_lm_head_jit.1} parent=67 // pred_region
          %p470 = scmp.lt.s32.totalorder %s23, 1
          %s471 = scalar_select %p470, %s23, 1
          %s472 = smul.addr %s471, 8
          %s473 = scalar_lea.vmem %s7, %s472
        $region72: #{_tag_lm_head_jit.1} parent=67 // pred_fallthru
          _
      $region68: #{_tag_lm_head_jit.1} parent=5 // pred_fallthru
        _
    $region6: #{_tag_lm_head_jit.1} parent=1 // loop_footer
      %s21 = sadd.s32 1, %s17
    $region7: #{_tag_lm_head_jit.1} parent=1 // loop_footer_branch
      %16 = sbr.rel target = $region3
    $region8: #{_tag_lm_head_jit.1} parent=1 // loop_exit
      _
    %474 = vsyncpa [#allocation3], 1
    %s475 = scalar_lea.sflag [#allocation3], 1
    %476 = vsyncpa %s475, 1
    %477 = vsyncpa [#allocation5], 1

</llo_original>
